<compile_context>
chip_gen: v7x
topology: tpu7x:2x2x1
jax: 0.10.0
libtpu: 0.0.40
codegen_flags: <defaults>
</compile_context>

<pallas_src>
import functools
from typing import NamedTuple

import jax
import jax.numpy as jnp
from jax.experimental import pallas as pl
from jax.experimental.pallas import tpu as pltpu


def _round_up(x, m):
    return (x + m - 1) // m * m


# ----------------------------------------------------------------------------
# One-time parameter preparation (padding + matmul fusion) — NOT per forward.
# ----------------------------------------------------------------------------
class ResLinearParams(NamedTuple):
    wcat: jax.Array   # (nin_p, nh_p + nout_p)  = [W11 | Wskip], zero padded
    bcat: jax.Array   # (1,     nh_p + nout_p)  = [b11 | bskip]
    w12:  jax.Array   # (nh_p, nout_p)
    b12:  jax.Array   # (1,    nout_p)
    n_in: int
    n_hidden: int
    n_out: int
    nin_p: int
    nh_p: int
    nout_p: int
    add_residual: bool


def init_res_linear_params(w11, b11, w12, b12, wskip, bskip):
    """Pad every feature dim to a lane-dense multiple of 128 and fuse the two
    x-consuming weight matrices into one [W11 | Wskip] slab. Done once."""
    n_in, n_hidden = w11.shape
    n_out = w12.shape[1]
    nin_p = _round_up(n_in, 128)
    nh_p = _round_up(n_hidden, 128)
    nout_p = _round_up(n_out, 128)
    dt = w11.dtype

    wcat = jnp.zeros((nin_p, nh_p + nout_p), dt)
    wcat = wcat.at[:n_in, :n_hidden].set(w11)
    wcat = wcat.at[:n_in, nh_p:nh_p + n_out].set(wskip)
    bcat = jnp.zeros((1, nh_p + nout_p), dt)
    bcat = bcat.at[:, :n_hidden].set(b11)
    bcat = bcat.at[:, nh_p:nh_p + n_out].set(bskip)
    w12p = jnp.zeros((nh_p, nout_p), dt).at[:n_hidden, :n_out].set(w12)
    b12p = jnp.zeros((1, nout_p), dt).at[:, :n_out].set(b12)

    return ResLinearParams(wcat, bcat, w12p, b12p,
                           n_in, n_hidden, n_out, nin_p, nh_p, nout_p,
                           add_residual=(n_in == n_out))


# ----------------------------------------------------------------------------
# Kernel
# ----------------------------------------------------------------------------
def _res_linear_kernel(x_ref, wcat_ref, bcat_ref, w12_ref, b12_ref, o_ref, *,
                       nh_p, add_residual):
    x = x_ref[...]                                             # (TB, nin_p) f32

    # One MXU pass produces [fc11_pre | skip] side by side.
    hc = jnp.dot(x, wcat_ref[...], preferred_element_type=jnp.float32)
    hc = hc + bcat_ref[...]                                    # single broadcast add

    h = hc[:, :nh_p]                                           # 128-aligned slice
    sk = hc[:, nh_p:]

    # LeakyReLU(0.2): max(h, 0.2*h) — one vmul + vmax on the VPU.
    h = jnp.maximum(h, 0.2 * h)

    # fc12
    nl = jnp.dot(h, w12_ref[...], preferred_element_type=jnp.float32)
    nl = nl + b12_ref[...]

    out = nl + sk
    if add_residual:                                           # static: n_in == n_out
        out = out + x
    o_ref[...] = out.astype(o_ref.dtype)


# ----------------------------------------------------------------------------
# Batch-tile selection: big tiles (amortize ~0.35us/step), even tile count for
# v7x's two TensorCores when more than one tile is needed.
# ----------------------------------------------------------------------------
def _pick_batch_tile(bp, tile_b):
    tb = max(8, (min(tile_b, bp) // 8) * 8)
    while bp % tb:
        tb -= 8
    n_tiles = bp // tb
    if n_tiles > 1 and n_tiles % 2 == 1:
        half = tb // 2
        if half >= 8 and half % 8 == 0 and bp % half == 0:
            tb = half        # doubles the tile count -> even split across 2 TCs
    return tb


# ----------------------------------------------------------------------------
# Padded-layout forward: chain these across layers; pad once / slice once.
# ----------------------------------------------------------------------------
def res_linear_padded(xp, params: ResLinearParams, *, tile_b=1024):
    """xp: (Bp, nin_p) already in the padded lane-dense layout, Bp % 8 == 0.
    Returns the padded output (Bp, nout_p) so consecutive ResLinear layers
    chain without per-layer HBM pad/slice passes."""
    bp, nin_p = xp.shape
    assert nin_p == params.nin_p and bp % 8 == 0
    nh_p, nout_p = params.nh_p, params.nout_p
    tb = _pick_batch_tile(bp, tile_b)
    n_tiles = bp // tb

    kernel = functools.partial(_res_linear_kernel, nh_p=nh_p,
                               add_residual=params.add_residual)

    itemsize = jnp.dtype(xp.dtype).itemsize
    weight_bytes = itemsize * (params.wcat.size + params.bcat.size +
                               params.w12.size + params.b12.size)
    flops = 2 * bp * (nin_p * (nh_p + nout_p) + nh_p * nout_p)
    bytes_accessed = itemsize * (bp * nin_p + bp * nout_p) + weight_bytes

    # Double-buffered x/out tiles + (double-buffered) resident weights + the
    # f32 temporaries for hc / h / nl; 2x headroom, floor at 32 MiB.
    vmem_est = (2 * itemsize * tb * (nin_p + nout_p)
                + 2 * weight_bytes
                + 4 * tb * (2 * (nh_p + nout_p)))
    vmem_limit = int(min(100 * 2**20, max(32 * 2**20, 2 * vmem_est)))

    return pl.pallas_call(
        kernel,
        out_shape=jax.ShapeDtypeStruct((bp, nout_p), xp.dtype),
        grid_spec=pltpu.PrefetchScalarGridSpec(
            num_scalar_prefetch=0,
            grid=(n_tiles,),
            in_specs=[
                pl.BlockSpec((tb, nin_p), lambda i: (i, 0)),             # x tile
                pl.BlockSpec((nin_p, nh_p + nout_p), lambda i: (0, 0)),  # Wcat (VMEM resident)
                pl.BlockSpec((1, nh_p + nout_p), lambda i: (0, 0)),      # bcat
                pl.BlockSpec((nh_p, nout_p), lambda i: (0, 0)),          # W12  (VMEM resident)
                pl.BlockSpec((1, nout_p), lambda i: (0, 0)),             # b12
            ],
            out_specs=pl.BlockSpec((tb, nout_p), lambda i: (i, 0)),
        ),
        compiler_params=pltpu.CompilerParams(
            dimension_semantics=("parallel",),
            vmem_limit_bytes=vmem_limit),
        cost_estimate=pl.CostEstimate(flops=flops, transcendentals=0,
                                      bytes_accessed=bytes_accessed),
    )(xp, params.wcat, params.bcat, params.w12, params.b12)


def pad_activations(x, nin_p):
    """Pad ONCE at network entry: batch -> multiple of 8 (sublane), features ->
    lane-dense nin_p.  Callers should flatten all spatial/batch dims into the
    leading axis first so one pallas_call covers every pixel."""
    b, n_in = x.shape
    bp = _round_up(b, 8)
    return jnp.zeros((bp, nin_p), x.dtype).at[:b, :n_in].set(x)


def res_linear(x, params: ResLinearParams, *, tile_b=1024):
    """Convenience one-shot wrapper: pad -> padded kernel -> slice.  For chains
    of ResLinear layers prefer pad_activations + res_linear_padded (+ a single
    final slice) so the padded layout is kept end-to-end."""
    b = x.shape[0]
    xp = pad_activations(x, params.nin_p)
    outp = res_linear_padded(xp, params, tile_b=tile_b)
    return outp[:b, :params.n_out]


# ----------------------------------------------------------------------------
# Pure-JAX reference + demo
# ----------------------------------------------------------------------------
def _ref_forward(x, w11, b11, w12, b12, wskip, bskip):
    h = x @ w11 + b11
    h = jnp.where(h > 0, h, 0.2 * h)
    nl = h @ w12 + b12
    sk = x @ wskip + bskip
    out = nl + sk
    if x.shape[1] == out.shape[1]:
        out = out + x
    return out


def _make_params(key, n_in, n_hidden, n_out):
    k11, k12, ksk = jax.random.split(key, 3)
    # Deterministic init (std=0.01 like fc_init_, biases zero), (in, out) layout.
    w11 = 0.01 * jax.random.normal(k11, (n_in, n_hidden), dtype=jnp.float32)
    b11 = jnp.zeros((1, n_hidden), dtype=jnp.float32)
    w12 = 0.01 * jax.random.normal(k12, (n_hidden, n_out), dtype=jnp.float32)
    b12 = jnp.zeros((1, n_out), dtype=jnp.float32)
    wsk = 0.01 * jax.random.normal(ksk, (n_in, n_out), dtype=jnp.float32)
    bsk = jnp.zeros((1, n_out), dtype=jnp.float32)
    return w11, b11, w12, b12, wsk, bsk


# TODO(synk): the surrounding res_GAT_up graph ops (knn_point, grouping_operation,
# furthest_point_sample / gather) are data-dependent gathers left to XLA; this
# kernel covers the ResLinear core that generates the conv2d_1x1_fixio weights.

if __name__ == "__main__":
    key = jax.random.PRNGKey(0)
    k1, k2, k3, kx1, kx2 = jax.random.split(key, 5)

    # ---- Config 1: two chained square ResLinear layers (residual path). -----
    # Activations stay in the padded lane-dense layout across the chain:
    # pad once at entry, two padded pallas_calls, slice once at exit.
    # (tile_b=16 here only to exercise the multi-tile / even-tile-count path at
    #  demo sizes; real workloads keep the default tile_b=1024.)
    B1, n_in1, n_h1, n_out1 = 48, 32, 32, 32
    x1 = jax.random.normal(kx1, (B1, n_in1), dtype=jnp.float32)
    raw_a = _make_params(k1, n_in1, n_h1, n_out1)
    raw_b = _make_params(k2, n_in1, n_h1, n_out1)
    pa = init_res_linear_params(*raw_a)     # done once at "module init"
    pb = init_res_linear_params(*raw_b)

    xp = pad_activations(x1, pa.nin_p)                        # pad once
    yp = res_linear_padded(xp, pa, tile_b=16)                 # layer 1 (padded)
    zp = res_linear_padded(yp, pb, tile_b=16)                 # layer 2 (padded)
    out1 = jax.block_until_ready(zp[:B1, :n_out1])            # slice once
    ref1 = _ref_forward(_ref_forward(x1, *raw_a), *raw_b)
    assert out1.shape == (B1, n_out1)
    assert jnp.allclose(out1, ref1, atol=1e-5, rtol=1e-5), "mismatch (chained residual cfg)"

    # ---- Config 2: skinny scalar input like skipfc2 in conv2d_1x1_fixio -----
    # ResLinear(1, n_out, n_=32); no residual branch.  B=1 is inherent to
    # skipfc2 (one scalar scale -> one weight vector per forward).
    B2, n_in2, n_h2, n_out2 = 1, 1, 32, 64
    x2 = jax.random.normal(kx2, (B2, n_in2), dtype=jnp.float32)
    raw_c = _make_params(k3, n_in2, n_h2, n_out2)
    pc = init_res_linear_params(*raw_c)
    out2 = jax.block_until_ready(res_linear(x2, pc))
    ref2 = _ref_forward(x2, *raw_c)
    assert out2.shape == (B2, n_out2)
    assert jnp.allclose(out2, ref2, atol=1e-5, rtol=1e-5), "mismatch (skinny cfg)"

    print("KERNEL_OK")
</pallas_src>

<mosaic_0001>
module attributes {stable_mosaic.version = 11 : i64} {
  func.func @_res_linear_kernel(%arg0: i32, %arg1: memref<8x128xf32, #tpu.memory_space<vmem>>, %arg2: memref<128x256xf32, #tpu.memory_space<vmem>>, %arg3: memref<1x256xf32, #tpu.memory_space<vmem>>, %arg4: memref<128x128xf32, #tpu.memory_space<vmem>>, %arg5: memref<1x128xf32, #tpu.memory_space<vmem>>, %arg6: memref<8x128xf32, #tpu.memory_space<vmem>>) attributes {dimension_semantics = [#tpu.dimension_semantics<parallel>], iteration_bounds = array<i64: 6>, scalar_prefetch = 0 : i64, scratch_operands = 0 : i64, tpu.core_type = #tpu.core_type<tc>, window_params = [{transform_indices = @transform_0, window_bounds = array<i64: 8, 128>}, {pipeline_mode = #tpu.pipeline_mode<synchronous>, transform_indices = @transform_1, window_bounds = array<i64: 128, 256>}, {pipeline_mode = #tpu.pipeline_mode<synchronous>, transform_indices = @transform_2, window_bounds = array<i64: 1, 256>}, {pipeline_mode = #tpu.pipeline_mode<synchronous>, transform_indices = @transform_3, window_bounds = array<i64: 128, 128>}, {pipeline_mode = #tpu.pipeline_mode<synchronous>, transform_indices = @transform_4, window_bounds = array<i64: 1, 128>}, {transform_indices = @transform_5, window_bounds = array<i64: 8, 128>}]} {
    %c0 = arith.constant 0 : index
    %c0_0 = arith.constant 0 : index
    %0 = vector.load %arg1[%c0, %c0_0] : memref<8x128xf32, #tpu.memory_space<vmem>>, vector<8x128xf32>
    %c0_1 = arith.constant 0 : index
    %c0_2 = arith.constant 0 : index
    %1 = vector.load %arg2[%c0_1, %c0_2] : memref<128x256xf32, #tpu.memory_space<vmem>>, vector<128x256xf32>
    %cst = arith.constant dense<0.000000e+00> : vector<8x256xf32>
    %2 = tpu.matmul %0, %1, %cst {dimension_numbers = #tpu.dot_dimension_numbers<[1], [0], [0], [1], [0, 0, 1, 1], [], []>} : vector<8x128xf32>, vector<128x256xf32>, vector<8x256xf32> -> vector<8x256xf32>
    %c0_3 = arith.constant 0 : index
    %c0_4 = arith.constant 0 : index
    %3 = vector.load %arg3[%c0_3, %c0_4] : memref<1x256xf32, #tpu.memory_space<vmem>>, vector<1x256xf32>
    %4 = vector.broadcast %3 : vector<1x256xf32> to vector<8x256xf32>
    %5 = arith.addf %2, %4 : vector<8x256xf32>
    %6 = vector.extract_strided_slice %5 {offsets = [0, 0], sizes = [8, 128], strides = [1, 1]} : vector<8x256xf32> to vector<8x128xf32>
    %7 = vector.extract_strided_slice %5 {offsets = [0, 128], sizes = [8, 128], strides = [1, 1]} : vector<8x256xf32> to vector<8x128xf32>
    %cst_5 = arith.constant 2.000000e-01 : f32
    %8 = vector.broadcast %cst_5 : f32 to vector<8x128xf32>
    %9 = arith.mulf %8, %6 : vector<8x128xf32>
    %10 = arith.maximumf %6, %9 : vector<8x128xf32>
    %c0_6 = arith.constant 0 : index
    %c0_7 = arith.constant 0 : index
    %11 = vector.load %arg4[%c0_6, %c0_7] : memref<128x128xf32, #tpu.memory_space<vmem>>, vector<128x128xf32>
    %cst_8 = arith.constant dense<0.000000e+00> : vector<8x128xf32>
    %12 = tpu.matmul %10, %11, %cst_8 {dimension_numbers = #tpu.dot_dimension_numbers<[1], [0], [0], [1], [0, 0, 1, 1], [], []>} : vector<8x128xf32>, vector<128x128xf32>, vector<8x128xf32> -> vector<8x128xf32>
    %c0_9 = arith.constant 0 : index
    %c0_10 = arith.constant 0 : index
    %13 = vector.load %arg5[%c0_9, %c0_10] : memref<1x128xf32, #tpu.memory_space<vmem>>, vector<1x128xf32>
    %14 = vector.broadcast %13 : vector<1x128xf32> to vector<8x128xf32>
    %15 = arith.addf %12, %14 : vector<8x128xf32>
    %16 = arith.addf %15, %7 : vector<8x128xf32>
    %17 = arith.addf %16, %0 : vector<8x128xf32>
    %c0_11 = arith.constant 0 : index
    %c0_12 = arith.constant 0 : index
    %18 = vector.load %arg6[%c0_11, %c0_12] : memref<8x128xf32, #tpu.memory_space<vmem>>, vector<8x128xf32>
    tpu.vector_store %arg6[%c0_11, %c0_12], %17 {strides = array<i32>} : memref<8x128xf32, #tpu.memory_space<vmem>>, vector<8x128xf32>,
    return
  }
  func.func @transform_0(%arg0: i32) -> (i32, i32) {
    %c0_i32 = arith.constant 0 : i32
    %c0_i32_0 = arith.constant 0 : i32
    return %arg0, %c0_i32 : i32, i32
  }
  func.func @transform_1(%arg0: i32) -> (i32, i32) {
    %c0_i32 = arith.constant 0 : i32
    %c0_i32_0 = arith.constant 0 : i32
    %c0_i32_1 = arith.constant 0 : i32
    return %c0_i32, %c0_i32_0 : i32, i32
  }
  func.func @transform_2(%arg0: i32) -> (i32, i32) {
    %c0_i32 = arith.constant 0 : i32
    %c0_i32_0 = arith.constant 0 : i32
    %c0_i32_1 = arith.constant 0 : i32
    return %c0_i32, %c0_i32_0 : i32, i32
  }
  func.func @transform_3(%arg0: i32) -> (i32, i32) {
    %c0_i32 = arith.constant 0 : i32
    %c0_i32_0 = arith.constant 0 : i32
    %c0_i32_1 = arith.constant 0 : i32
    return %c0_i32, %c0_i32_0 : i32, i32
  }
  func.func @transform_4(%arg0: i32) -> (i32, i32) {
    %c0_i32 = arith.constant 0 : i32
    %c0_i32_0 = arith.constant 0 : i32
    %c0_i32_1 = arith.constant 0 : i32
    return %c0_i32, %c0_i32_0 : i32, i32
  }
  func.func @transform_5(%arg0: i32) -> (i32, i32) {
    %c0_i32 = arith.constant 0 : i32
    %c0_i32_0 = arith.constant 0 : i32
    return %arg0, %c0_i32 : i32, i32
  }
}

</mosaic_0001>

<llo_original>
// kernel: tpu_custom_call.1
$region0: #{tpu_custom_call.1}
  #allocation0 [shape = 'u32[]', space=smem, size = 0x4, offset = 0x4, fixed_abs, tag = 'smem constant byte address 0x4 - core index']
  #allocation1 [shape = 'u32[144,128]{1,0:T(1,128)}', space=vmem, size = 0x12000, scoped, tag = 'internal scratch']
  %s0 = inlined_call_operand.hbm [shape: f32[48,128], index: 0, kind: input, shape index: {}]
  %s1 = inlined_call_operand.hbm [shape: f32[128,256], index: 1, kind: input, shape index: {}]
  %s2 = inlined_call_operand.vmem [shape: f32[1,256], index: 2, kind: input, shape index: {}]
  %s3 = inlined_call_operand.hbm [shape: f32[128,128], index: 3, kind: input, shape index: {}]
  %s4 = inlined_call_operand.vmem [shape: f32[1,128], index: 4, kind: input, shape index: {}]
  %s5 = inlined_call_operand.hbm [shape: f32[48,128], index: 5, kind: output, shape index: {}]
  %s6 = sld [smem:[#allocation0]]
  $region65: #{tpu_custom_call.1} parent=0
    _
  %s8 = ssub.s32 1, %s6
  %s9 = scalar_select 0, %s8, %s6
  $region1: #{tpu_custom_call.1} parent=0
    #allocation2 [shape = 'u8[8192]{0}', space=vmem, size = 0x2000, scoped, tag = 'input window, operand 0']
    #allocation3 [shape = 's32[2]{0}', space=sflag, size = 0x8, scoped, tag = 'scoped memory for tpu_custom_call.1']
    #allocation4 [shape = 's32[2]{0}', space=sflag, size = 0x8, scoped, tag = 'scoped memory for tpu_custom_call.1']
    #allocation5 [shape = 'u8[131072]{0}', space=vmem, size = 0x20000, scoped, tag = 'input window, operand 1, single buffered']
    #allocation6 [shape = 's32[1]{0}', space=sflag, size = 0x4, scoped, tag = 'scoped memory for tpu_custom_call.1']
    #allocation7 [shape = 'u8[65536]{0}', space=vmem, size = 0x10000, scoped, tag = 'input window, operand 3, single buffered']
    #allocation8 [shape = 'u8[8192]{0}', space=vmem, size = 0x2000, scoped, tag = 'output window, operand 0']
    %10 = vsyncpa [#allocation3], 0
    %s11 = scalar_lea.sflag [#allocation3], 1
    %12 = vsyncpa %s11, 0
    %13 = vsyncpa [#allocation6], 0
    %14 = vsyncpa [#allocation4], 0
    %s15 = scalar_lea.sflag [#allocation4], 1
    %16 = vsyncpa %s15, 0
    loop: start=0, step=1, limit=8
    $region2: #{tpu_custom_call.1} parent=1 // loop_pre_header
      _
    $region3: #{tpu_custom_call.1} parent=1 // loop_header
      %s18 = sphi 0, %s22
      %p19 = scmp.ge.s32.totalorder %s18, 8
      %s28 = sphi 0, %s30
      %s31 = sphi 0, %s28
      %s32 = sphi 0, %s31
      %s48 = sphi 0, %s32
      %s52 = sphi 0, %s52
      %s54 = sphi 0, %s52
      %s55 = sphi 0, %s54
      %s69 = sphi 0, %s55
      %s73 = sphi 0, %s73
      %s75 = sphi 0, %s73
      %s76 = sphi 0, %s75
      %s90 = sphi 0, %s76
      %s94 = sphi 0, %s94
      %s96 = sphi 0, %s94
      %s97 = sphi 0, %s96
      %s111 = sphi 0, %s97
      %s115 = sphi 0, %s115
      %s117 = sphi 0, %s115
      %s118 = sphi 0, %s117
      %s132 = sphi 0, %s118
      %s138 = sphi 0, %s140
      %s141 = sphi 0, %s138
      %s142 = sphi 0, %s141
      %s158 = sphi 0, %s142
    $region4: #{tpu_custom_call.1} parent=1 // loop_header_branch
      %21 = sbr.rel (%p19) target = $region8
    $region5: #{tpu_custom_call.1} parent=1 // loop_body
      %s23 = ssub.s32 %s18, 1
      %s24 = ssub.s32 %s18, 2
      %s25 = sadd.s32 %s18, 1
      %s26 = ssub.s32 %s18, %s25
      %p27 = scmp.eq.s32.totalorder %s26, 0
      %s29 = sadd.s32 %s28, 1
      %s30 = scalar_select %p27, %s28, %s29
      %p33 = pneg %p27
      %p34 = scmp.eq.s32.totalorder %s18, 5
      %p35 = por %p33, %p34
      %p36 = scmp.ne.s32.totalorder %s28, %s31
      %p37 = scmp.eq.s32.totalorder %s18, 0
      %p38 = por %p36, %p37
      %p39 = scmp.ne.s32.totalorder %s28, %s31
      %p40 = scmp.eq.s32.totalorder %s23, 5
      %p41 = por %p39, %p40
      %p42 = scmp.ne.s32.totalorder %s31, %s32
      %p43 = scmp.eq.s32.totalorder %s23, 0
      %p44 = por %p42, %p43
      %p45 = scmp.ne.s32.totalorder %s31, %s32
      %p46 = scmp.eq.s32.totalorder %s24, 5
      %p47 = por %p45, %p46
      %p49 = scmp.ne.s32.totalorder %s32, %s48
      %p50 = scmp.eq.s32.totalorder %s24, 0
      %p51 = por %p49, %p50
      %s53 = sadd.s32 %s52, 1
      %p56 = scmp.eq.s32.totalorder %s18, 5
      %p57 = scmp.ne.s32.totalorder %s52, %s54
      %p58 = scmp.eq.s32.totalorder %s18, 0
      %p59 = por %p57, %p58
      %p60 = scmp.ne.s32.totalorder %s52, %s54
      %p61 = scmp.eq.s32.totalorder %s23, 5
      %p62 = por %p60, %p61
      %p63 = scmp.ne.s32.totalorder %s54, %s55
      %p64 = scmp.eq.s32.totalorder %s23, 0
      %p65 = por %p63, %p64
      %p66 = scmp.ne.s32.totalorder %s54, %s55
      %p67 = scmp.eq.s32.totalorder %s24, 5
      %p68 = por %p66, %p67
      %p70 = scmp.ne.s32.totalorder %s55, %s69
      %p71 = scmp.eq.s32.totalorder %s24, 0
      %p72 = por %p70, %p71
      %s74 = sadd.s32 %s73, 1
      %p77 = scmp.eq.s32.totalorder %s18, 5
      %p78 = scmp.ne.s32.totalorder %s73, %s75
      %p79 = scmp.eq.s32.totalorder %s18, 0
      %p80 = por %p78, %p79
      %p81 = scmp.ne.s32.totalorder %s73, %s75
      %p82 = scmp.eq.s32.totalorder %s23, 5
      %p83 = por %p81, %p82
      %p84 = scmp.ne.s32.totalorder %s75, %s76
      %p85 = scmp.eq.s32.totalorder %s23, 0
      %p86 = por %p84, %p85
      %p87 = scmp.ne.s32.totalorder %s75, %s76
      %p88 = scmp.eq.s32.totalorder %s24, 5
      %p89 = por %p87, %p88
      %p91 = scmp.ne.s32.totalorder %s76, %s90
      %p92 = scmp.eq.s32.totalorder %s24, 0
      %p93 = por %p91, %p92
      %s95 = sadd.s32 %s94, 1
      %p98 = scmp.eq.s32.totalorder %s18, 5
      %p99 = scmp.ne.s32.totalorder %s94, %s96
      %p100 = scmp.eq.s32.totalorder %s18, 0
      %p101 = por %p99, %p100
      %p102 = scmp.ne.s32.totalorder %s94, %s96
      %p103 = scmp.eq.s32.totalorder %s23, 5
      %p104 = por %p102, %p103
      %p105 = scmp.ne.s32.totalorder %s96, %s97
      %p106 = scmp.eq.s32.totalorder %s23, 0
      %p107 = por %p105, %p106
      %p108 = scmp.ne.s32.totalorder %s96, %s97
      %p109 = scmp.eq.s32.totalorder %s24, 5
      %p110 = por %p108, %p109
      %p112 = scmp.ne.s32.totalorder %s97, %s111
      %p113 = scmp.eq.s32.totalorder %s24, 0
      %p114 = por %p112, %p113
      %s116 = sadd.s32 %s115, 1
      %p119 = scmp.eq.s32.totalorder %s18, 5
      %p120 = scmp.ne.s32.totalorder %s115, %s117
      %p121 = scmp.eq.s32.totalorder %s18, 0
      %p122 = por %p120, %p121
      %p123 = scmp.ne.s32.totalorder %s115, %s117
      %p124 = scmp.eq.s32.totalorder %s23, 5
      %p125 = por %p123, %p124
      %p126 = scmp.ne.s32.totalorder %s117, %s118
      %p127 = scmp.eq.s32.totalorder %s23, 0
      %p128 = por %p126, %p127
      %p129 = scmp.ne.s32.totalorder %s117, %s118
      %p130 = scmp.eq.s32.totalorder %s24, 5
      %p131 = por %p129, %p130
      %p133 = scmp.ne.s32.totalorder %s118, %s132
      %p134 = scmp.eq.s32.totalorder %s24, 0
      %p135 = por %p133, %p134
      %s136 = ssub.s32 %s18, %s25
      %p137 = scmp.eq.s32.totalorder %s136, 0
      %s139 = sadd.s32 %s138, 1
      %s140 = scalar_select %p137, %s138, %s139
      %p143 = pneg %p137
      %p144 = scmp.eq.s32.totalorder %s18, 5
      %p145 = por %p143, %p144
      %p146 = scmp.ne.s32.totalorder %s138, %s141
      %p147 = scmp.eq.s32.totalorder %s18, 0
      %p148 = por %p146, %p147
      %p149 = scmp.ne.s32.totalorder %s138, %s141
      %p150 = scmp.eq.s32.totalorder %s23, 5
      %p151 = por %p149, %p150
      %p152 = scmp.ne.s32.totalorder %s141, %s142
      %p153 = scmp.eq.s32.totalorder %s23, 0
      %p154 = por %p152, %p153
      %p155 = scmp.ne.s32.totalorder %s141, %s142
      %p156 = scmp.eq.s32.totalorder %s24, 5
      %p157 = por %p155, %p156
      %p159 = scmp.ne.s32.totalorder %s142, %s158
      %p160 = scmp.eq.s32.totalorder %s24, 0
      %p161 = por %p159, %p160
      %p162 = scmp.le.s32.totalorder 1, %s18
      %p163 = scmp.lt.s32.totalorder %s18, 7
      %p164 = pnand %p162, %p163
      %p165 = pneg %p164
      // Predicated region
      $region9: #{tpu_custom_call.1} parent=5 // pred_check
        _
      $region10: #{tpu_custom_call.1} parent=5 // pred_check_branch
        %167 = sbr.rel (%p164) target = $region12
      $region11: #{tpu_custom_call.1} parent=5 // pred_region
        %s168 = ssub.s32 %s18, 1
        // Predicated region
        $region13: #{tpu_custom_call.1} parent=11 // pred_check
          %p169 = pneg %p65
        $region14: #{tpu_custom_call.1} parent=11 // pred_check_branch
          %171 = sbr.rel (%p169) target = $region16
        $region15: #{tpu_custom_call.1} parent=11 // pred_region
          %s173 = ssub.s32 4096, 4096
          %174 = vsyncadd [#allocation6], %s173
          %s175 = sshll.u32 [#allocation5], 4
          %s176 = int_to_ptr.vmem [resolvable:$true] %s175
          %181 = dma.hbm_to_vmem [thread:$0]  %s1, 4096, %s176, [#allocation6], 256, 256, 16
        $region16: #{tpu_custom_call.1} parent=11 // pred_fallthru
          _
        // Predicated region
        $region17: #{tpu_custom_call.1} parent=11 // pred_check
          %p182 = pneg %p86
        $region18: #{tpu_custom_call.1} parent=11 // pred_check_branch
          %184 = sbr.rel (%p182) target = $region20
        $region19: #{tpu_custom_call.1} parent=11 // pred_region
          _
        $region20: #{tpu_custom_call.1} parent=11 // pred_fallthru
          _
        // Predicated region
        $region21: #{tpu_custom_call.1} parent=11 // pred_check
          %p185 = pneg %p107
        $region22: #{tpu_custom_call.1} parent=11 // pred_check_branch
          %187 = sbr.rel (%p185) target = $region24
        $region23: #{tpu_custom_call.1} parent=11 // pred_region
          %s189 = ssub.s32 2048, 2048
          %190 = vsyncadd [#allocation6], %s189
          %s191 = sshll.u32 [#allocation7], 4
          %s192 = int_to_ptr.vmem [resolvable:$true] %s191
          %197 = dma.hbm_to_vmem [thread:$0]  %s3, 2048, %s192, [#allocation6], 128, 128, 8
        $region24: #{tpu_custom_call.1} parent=11 // pred_fallthru
          _
        // Predicated region
        $region25: #{tpu_custom_call.1} parent=11 // pred_check
          %p198 = pneg %p128
        $region26: #{tpu_custom_call.1} parent=11 // pred_check_branch
          %200 = sbr.rel (%p198) target = $region28
        $region27: #{tpu_custom_call.1} parent=11 // pred_region
          _
        $region28: #{tpu_custom_call.1} parent=11 // pred_fallthru
          _
      $region12: #{tpu_custom_call.1} parent=5 // pred_fallthru
        _
      %p201 = scmp.lt.s32.totalorder %s18, 6
      // Predicated region
      $region29: #{tpu_custom_call.1} parent=5 // pred_check
        %p202 = pneg %p201
      $region30: #{tpu_custom_call.1} parent=5 // pred_check_branch
        %204 = sbr.rel (%p202) target = $region32
      $region31: #{tpu_custom_call.1} parent=5 // pred_region
        // Predicated region
        $region33: #{tpu_custom_call.1} parent=31 // pred_check
          %p205 = pneg %p38
        $region34: #{tpu_custom_call.1} parent=31 // pred_check_branch
          %207 = sbr.rel (%p205) target = $region36
        $region35: #{tpu_custom_call.1} parent=31 // pred_region
          %s208 = sand.u32 %s28, 1
          %s209 = scalar_lea.sflag [#allocation3], %s208
          %s210 = sand.u32 %s28, 1
          %s211 = smul.addr %s210, 8
          %s212 = scalar_lea.vmem [#allocation2], %s211
          %s214 = ssub.s32 128, 128
          %215 = vsyncadd %s209, %s214
          %s216 = smul.addr %s18, 128
          %s217 = scalar_lea.hbm %s0, %s216
          %s219 = sshll.u32 %s212, 4
          %s220 = int_to_ptr.vmem [resolvable:$true] %s219
          %222 = dma.hbm_to_vmem [thread:$0]  %s217, 128, %s220, %s209
        $region36: #{tpu_custom_call.1} parent=31 // pred_fallthru
          _
      $region32: #{tpu_custom_call.1} parent=5 // pred_fallthru
        _
      %p223 = scmp.le.s32.totalorder 1, %s18
      %p224 = scmp.lt.s32.totalorder %s18, 7
      %p225 = pnand %p223, %p224
      %p226 = pneg %p225
      // Predicated region
      $region37: #{tpu_custom_call.1} parent=5 // pred_check
        _
      $region38: #{tpu_custom_call.1} parent=5 // pred_check_branch
        %228 = sbr.rel (%p225) target = $region40
      $region39: #{tpu_custom_call.1} parent=5 // pred_region
        %s229 = ssub.s32 %s18, 1
        %s230 = sand.u32 %s31, 1
        %s231 = scalar_lea.sflag [#allocation3], %s230
        %s232 = sand.u32 %s31, 1
        %s233 = smul.addr %s232, 8
        %s234 = scalar_lea.vmem [#allocation2], %s233
        // Predicated region
        $region41: #{tpu_custom_call.1} parent=39 // pred_check
          %p235 = pneg %p44
        $region42: #{tpu_custom_call.1} parent=39 // pred_check_branch
          %237 = sbr.rel (%p235) target = $region44
        $region43: #{tpu_custom_call.1} parent=39 // pred_region
          %238 = dma.done %s231, 128
        $region44: #{tpu_custom_call.1} parent=39 // pred_fallthru
          _
        // Predicated region
        $region45: #{tpu_custom_call.1} parent=39 // pred_check
          %p239 = pneg %p65
        $region46: #{tpu_custom_call.1} parent=39 // pred_check_branch
          %241 = sbr.rel (%p239) target = $region48
        $region47: #{tpu_custom_call.1} parent=39 // pred_region
          %242 = dma.done [#allocation6], 4096
        $region48: #{tpu_custom_call.1} parent=39 // pred_fallthru
          _
        // Predicated region
        $region49: #{tpu_custom_call.1} parent=39 // pred_check
          %p243 = pneg %p107
        $region50: #{tpu_custom_call.1} parent=39 // pred_check_branch
          %245 = sbr.rel (%p243) target = $region52
        $region51: #{tpu_custom_call.1} parent=39 // pred_region
          %246 = dma.done [#allocation6], 2048
        $region52: #{tpu_custom_call.1} parent=39 // pred_fallthru
          _
        %s247 = sand.u32 %s31, 1
        %s248 = scalar_lea.sflag [#allocation3], %s247
        %s249 = sand.u32 %s31, 1
        %s250 = smul.addr %s249, 8
        %s251 = scalar_lea.vmem [#allocation2], %s250
        %p252 = pneg %p44
        %p253 = pneg %p41
        %p254 = pneg %p65
        %p255 = pneg %p62
        %p256 = pneg %p86
        %p257 = pneg %p83
        %p258 = pneg %p107
        %p259 = pneg %p104
        %p260 = pneg %p128
        %p261 = pneg %p125
        %p262 = pneg %p154
        %p263 = pneg %p151
        %s264 = sand.u32 %s141, 1
        %s265 = scalar_lea.sflag [#allocation4], %s264
        %s266 = sand.u32 %s141, 1
        %s267 = smul.addr %s266, 8
        %s268 = scalar_lea.vmem [#allocation8], %s267
        %v269 = vld [vmem:[%s234] sm:$0xff]
        %v270 = vld [vmem:[#allocation5] sm:$0xff]
        %v271 = vld [vmem:[#allocation5 + $0x8] sm:$0xff]
        %v272 = vld [vmem:[#allocation5 + $0x10] sm:$0xff]
        %v273 = vld [vmem:[#allocation5 + $0x18] sm:$0xff]
        %v274 = vld [vmem:[#allocation5 + $0x20] sm:$0xff]
        %v275 = vld [vmem:[#allocation5 + $0x28] sm:$0xff]
        %v276 = vld [vmem:[#allocation5 + $0x30] sm:$0xff]
        %v277 = vld [vmem:[#allocation5 + $0x38] sm:$0xff]
        %v278 = vld [vmem:[#allocation5 + $0x40] sm:$0xff]
        %v279 = vld [vmem:[#allocation5 + $0x48] sm:$0xff]
        %v280 = vld [vmem:[#allocation5 + $0x50] sm:$0xff]
        %v281 = vld [vmem:[#allocation5 + $0x58] sm:$0xff]
        %v282 = vld [vmem:[#allocation5 + $0x60] sm:$0xff]
        %v283 = vld [vmem:[#allocation5 + $0x68] sm:$0xff]
        %v284 = vld [vmem:[#allocation5 + $0x70] sm:$0xff]
        %v285 = vld [vmem:[#allocation5 + $0x78] sm:$0xff]
        %v286 = vld [vmem:[#allocation5 + $0x80] sm:$0xff]
        %v287 = vld [vmem:[#allocation5 + $0x88] sm:$0xff]
        %v288 = vld [vmem:[#allocation5 + $0x90] sm:$0xff]
        %v289 = vld [vmem:[#allocation5 + $0x98] sm:$0xff]
        %v290 = vld [vmem:[#allocation5 + $0xa0] sm:$0xff]
        %v291 = vld [vmem:[#allocation5 + $0xa8] sm:$0xff]
        %v292 = vld [vmem:[#allocation5 + $0xb0] sm:$0xff]
        %v293 = vld [vmem:[#allocation5 + $0xb8] sm:$0xff]
        %v294 = vld [vmem:[#allocation5 + $0xc0] sm:$0xff]
        %v295 = vld [vmem:[#allocation5 + $0xc8] sm:$0xff]
        %v296 = vld [vmem:[#allocation5 + $0xd0] sm:$0xff]
        %v297 = vld [vmem:[#allocation5 + $0xd8] sm:$0xff]
        %v298 = vld [vmem:[#allocation5 + $0xe0] sm:$0xff]
        %v299 = vld [vmem:[#allocation5 + $0xe8] sm:$0xff]
        %v300 = vld [vmem:[#allocation5 + $0xf0] sm:$0xff]
        %v301 = vld [vmem:[#allocation5 + $0xf8] sm:$0xff]
        %v302 = vld [vmem:[%s2] sm:$0x3]
        %v304 = vlaneseq
        %v305 = vshrl.u32 %v304, 7
        %v306 = vsub.s32 0, %v305
        %v307 = vrot.slane %v302, %v306
        %v308 = vlaneseq
        %v309 = vshrl.u32 %v308, 7
        %v310 = vsub.s32 1, %v309
        %v311 = vrot.slane %v302, %v310
        %314 = vmatprep.subr.mxu0 %v271
        %315 = vmatpush1.msra.mxu0 %v270
        %316 = vmatprep.subr.mxu0 %v273
        %317 = vmatpush1.msra.mxu0 %v272
        %318 = vmatprep.subr.mxu0 %v275
        %319 = vmatpush1.msra.mxu0 %v274
        %320 = vmatprep.subr.mxu0 %v277
        %321 = vmatpush1.msra.mxu0 %v276
        %322 = vmatprep.subr.mxu0 %v279
        %323 = vmatpush1.msra.mxu0 %v278
        %324 = vmatprep.subr.mxu0 %v281
        %325 = vmatpush1.msra.mxu0 %v280
        %326 = vmatprep.subr.mxu0 %v283
        %327 = vmatpush1.msra.mxu0 %v282
        %328 = vmatprep.subr.mxu0 %v285
        %329 = vmatpush1.msra.mxu0 %v284
        %330 = vmatprep.subr.mxu0 %v287
        %331 = vmatpush1.msra.mxu0 %v286
        %332 = vmatprep.subr.mxu0 %v289
        %333 = vmatpush1.msra.mxu0 %v288
        %334 = vmatprep.subr.mxu0 %v291
        %335 = vmatpush1.msra.mxu0 %v290
        %336 = vmatprep.subr.mxu0 %v293
        %337 = vmatpush1.msra.mxu0 %v292
        %338 = vmatprep.subr.mxu0 %v295
        %339 = vmatpush1.msra.mxu0 %v294
        %340 = vmatprep.subr.mxu0 %v297
        %341 = vmatpush1.msra.mxu0 %v296
        %342 = vmatprep.subr.mxu0 %v299
        %343 = vmatpush1.msra.mxu0 %v298
        %344 = vmatprep.subr.mxu0 %v301
        %345 = vmatpush1.msra.mxu0 %v300
        %346 = vmatprep.subr.mxu0 0.0
        %347 = vmatpush1.msra.mxu0 0.0
        %348 = vmatprep.subr.mxu0 0.0
        %349 = vmatpush1.msra.mxu0 0.0
        %350 = vmatprep.subr.mxu0 0.0
        %351 = vmatpush1.msra.mxu0 0.0
        %352 = vmatprep.subr.mxu0 0.0
        %353 = vmatpush1.msra.mxu0 0.0
        %354 = vmatprep.subr.mxu0 0.0
        %355 = vmatpush1.msra.mxu0 0.0
        %356 = vmatprep.subr.mxu0 0.0
        %357 = vmatpush1.msra.mxu0 0.0
        %358 = vmatprep.subr.mxu0 0.0
        %359 = vmatpush1.msra.mxu0 0.0
        %360 = vmatprep.subr.mxu0 0.0
        %361 = vmatpush1.msra.mxu0 0.0
        %362 = vmatprep.subr.mxu0 0.0
        %363 = vmatpush1.msra.mxu0 0.0
        %364 = vmatprep.subr.mxu0 0.0
        %365 = vmatpush1.msra.mxu0 0.0
        %366 = vmatprep.subr.mxu0 0.0
        %367 = vmatpush1.msra.mxu0 0.0
        %368 = vmatprep.subr.mxu0 0.0
        %369 = vmatpush1.msra.mxu0 0.0
        %370 = vmatprep.subr.mxu0 0.0
        %371 = vmatpush1.msra.mxu0 0.0
        %372 = vmatprep.subr.mxu0 0.0
        %373 = vmatpush1.msra.mxu0 0.0
        %374 = vmatprep.subr.mxu0 0.0
        %375 = vmatpush1.msra.mxu0 0.0
        %376 = vmatprep.subr.mxu0 0.0
        %377 = vmatpush1.msra.mxu0 0.0
        %378 = vmatprep.mubr.f32.mxu0 0.0
        %379 = vmatmul.mubr.f32.gmra.mrb[0].mxu0 %v269
        %v380 = vpop.f32.mrb[0].mxu0
        %v381 = vadd.f32 %v307, %v380
        %v382 = vpop.f32.mrb[0].mxu0
        %v383 = vadd.f32 %v311, %v382
        %384 = vdwg.mxu0
        %v385 = vmul.f32 %v381, 0.2
        %v386 = vmax.f32 %v381, %v385
        %v387 = vld [vmem:[#allocation7] sm:$0xff]
        %v388 = vld [vmem:[#allocation7 + $0x8] sm:$0xff]
        %v389 = vld [vmem:[#allocation7 + $0x10] sm:$0xff]
        %v390 = vld [vmem:[#allocation7 + $0x18] sm:$0xff]
        %v391 = vld [vmem:[#allocation7 + $0x20] sm:$0xff]
        %v392 = vld [vmem:[#allocation7 + $0x28] sm:$0xff]
        %v393 = vld [vmem:[#allocation7 + $0x30] sm:$0xff]
        %v394 = vld [vmem:[#allocation7 + $0x38] sm:$0xff]
        %v395 = vld [vmem:[#allocation7 + $0x40] sm:$0xff]
        %v396 = vld [vmem:[#allocation7 + $0x48] sm:$0xff]
        %v397 = vld [vmem:[#allocation7 + $0x50] sm:$0xff]
        %v398 = vld [vmem:[#allocation7 + $0x58] sm:$0xff]
        %v399 = vld [vmem:[#allocation7 + $0x60] sm:$0xff]
        %v400 = vld [vmem:[#allocation7 + $0x68] sm:$0xff]
        %v401 = vld [vmem:[#allocation7 + $0x70] sm:$0xff]
        %v402 = vld [vmem:[#allocation7 + $0x78] sm:$0xff]
        %v403 = vld [vmem:[%s4] sm:$0x1]
        %v405 = vlaneseq
        %v406 = vshrl.u32 %v405, 7
        %v407 = vsub.s32 0, %v406
        %v408 = vrot.slane %v403, %v407
        %410 = vmatprep.subr.mxu0 0.0
        %411 = vmatpush1.msra.mxu0 %v387
        %412 = vmatprep.subr.mxu0 0.0
        %413 = vmatpush1.msra.mxu0 %v388
        %414 = vmatprep.subr.mxu0 0.0
        %415 = vmatpush1.msra.mxu0 %v389
        %416 = vmatprep.subr.mxu0 0.0
        %417 = vmatpush1.msra.mxu0 %v390
        %418 = vmatprep.subr.mxu0 0.0
        %419 = vmatpush1.msra.mxu0 %v391
        %420 = vmatprep.subr.mxu0 0.0
        %421 = vmatpush1.msra.mxu0 %v392
        %422 = vmatprep.subr.mxu0 0.0
        %423 = vmatpush1.msra.mxu0 %v393
        %424 = vmatprep.subr.mxu0 0.0
        %425 = vmatpush1.msra.mxu0 %v394
        %426 = vmatprep.subr.mxu0 0.0
        %427 = vmatpush1.msra.mxu0 %v395
        %428 = vmatprep.subr.mxu0 0.0
        %429 = vmatpush1.msra.mxu0 %v396
        %430 = vmatprep.subr.mxu0 0.0
        %431 = vmatpush1.msra.mxu0 %v397
        %432 = vmatprep.subr.mxu0 0.0
        %433 = vmatpush1.msra.mxu0 %v398
        %434 = vmatprep.subr.mxu0 0.0
        %435 = vmatpush1.msra.mxu0 %v399
        %436 = vmatprep.subr.mxu0 0.0
        %437 = vmatpush1.msra.mxu0 %v400
        %438 = vmatprep.subr.mxu0 0.0
        %439 = vmatpush1.msra.mxu0 %v401
        %440 = vmatprep.subr.mxu0 0.0
        %441 = vmatpush1.msra.mxu0 %v402
        %442 = vmatprep.subr.mxu0 0.0
        %443 = vmatpush1.msra.mxu0 0.0
        %444 = vmatprep.subr.mxu0 0.0
        %445 = vmatpush1.msra.mxu0 0.0
        %446 = vmatprep.subr.mxu0 0.0
        %447 = vmatpush1.msra.mxu0 0.0
        %448 = vmatprep.subr.mxu0 0.0
        %449 = vmatpush1.msra.mxu0 0.0
        %450 = vmatprep.subr.mxu0 0.0
        %451 = vmatpush1.msra.mxu0 0.0
        %452 = vmatprep.subr.mxu0 0.0
        %453 = vmatpush1.msra.mxu0 0.0
        %454 = vmatprep.subr.mxu0 0.0
        %455 = vmatpush1.msra.mxu0 0.0
        %456 = vmatprep.subr.mxu0 0.0
        %457 = vmatpush1.msra.mxu0 0.0
        %458 = vmatprep.subr.mxu0 0.0
        %459 = vmatpush1.msra.mxu0 0.0
        %460 = vmatprep.subr.mxu0 0.0
        %461 = vmatpush1.msra.mxu0 0.0
        %462 = vmatprep.subr.mxu0 0.0
        %463 = vmatpush1.msra.mxu0 0.0
        %464 = vmatprep.subr.mxu0 0.0
        %465 = vmatpush1.msra.mxu0 0.0
        %466 = vmatprep.subr.mxu0 0.0
        %467 = vmatpush1.msra.mxu0 0.0
        %468 = vmatprep.subr.mxu0 0.0
        %469 = vmatpush1.msra.mxu0 0.0
        %470 = vmatprep.subr.mxu0 0.0
        %471 = vmatpush1.msra.mxu0 0.0
        %472 = vmatprep.subr.mxu0 0.0
        %473 = vmatpush1.msra.mxu0 0.0
        %474 = vmatprep.mubr.f32.mxu0 0.0
        %475 = vmatmul.mubr.f32.gmra.mrb[0].mxu0 %v386
        %v476 = vpop.f32.mrb[0].mxu0
        %v477 = vadd.f32 %v408, %v476
        %v478 = vpop.f32.mrb[0].mxu0
        %479 = vdwg.mxu0
        %v480 = vadd.f32 %v477, %v383
        %v481 = vadd.f32 %v480, %v269
        %482 = vst [vmem:[%s268] sm:$0xff] %v481
        %s483 = sand.u32 %s141, 1
        %s484 = scalar_lea.sflag [#allocation4], %s483
        %s485 = sand.u32 %s141, 1
        %s486 = smul.addr %s485, 8
        %s487 = scalar_lea.vmem [#allocation8], %s486
        // Predicated region
        $region53: #{tpu_custom_call.1} parent=39 // pred_check
          %p488 = pneg %p151
        $region54: #{tpu_custom_call.1} parent=39 // pred_check_branch
          %490 = sbr.rel (%p488) target = $region56
        $region55: #{tpu_custom_call.1} parent=39 // pred_region
          %s492 = ssub.s32 128, 128
          %493 = vsyncadd %s484, %s492
          %s494 = smul.addr %s23, 128
          %s495 = scalar_lea.hbm %s5, %s494
          %s497 = sshll.u32 %s487, 4
          %s498 = int_to_ptr.vmem [resolvable:$true] %s497
          %500 = dma.vmem_to_hbm [thread:$0]  %s498, 128, %s495, %s484
        $region56: #{tpu_custom_call.1} parent=39 // pred_fallthru
          _
      $region40: #{tpu_custom_call.1} parent=5 // pred_fallthru
        _
      %p501 = scmp.le.s32.totalorder 2, %s18
      // Predicated region
      $region57: #{tpu_custom_call.1} parent=5 // pred_check
        %p502 = pneg %p501
      $region58: #{tpu_custom_call.1} parent=5 // pred_check_branch
        %504 = sbr.rel (%p502) target = $region60
      $region59: #{tpu_custom_call.1} parent=5 // pred_region
        %s505 = ssub.s32 %s18, 2
        // Predicated region
        $region61: #{tpu_custom_call.1} parent=59 // pred_check
          %p506 = pneg %p157
        $region62: #{tpu_custom_call.1} parent=59 // pred_check_branch
          %508 = sbr.rel (%p506) target = $region64
        $region63: #{tpu_custom_call.1} parent=59 // pred_region
          %s509 = sand.u32 %s142, 1
          %s510 = scalar_lea.sflag [#allocation4], %s509
          %s511 = sand.u32 %s142, 1
          %s512 = smul.addr %s511, 8
          %s513 = scalar_lea.vmem [#allocation8], %s512
          %514 = dma.done %s510, 128
        $region64: #{tpu_custom_call.1} parent=59 // pred_fallthru
          _
      $region60: #{tpu_custom_call.1} parent=5 // pred_fallthru
        _
    $region6: #{tpu_custom_call.1} parent=1 // loop_footer
      %s22 = sadd.s32 1, %s18
    $region7: #{tpu_custom_call.1} parent=1 // loop_footer_branch
      %17 = sbr.rel target = $region3
    $region8: #{tpu_custom_call.1} parent=1 // loop_exit
      _
    %515 = vsyncpa [#allocation3], 1
    %s516 = scalar_lea.sflag [#allocation3], 1
    %517 = vsyncpa %s516, 1
    %518 = vsyncpa [#allocation6], 1
    %519 = vsyncpa [#allocation4], 1
    %s520 = scalar_lea.sflag [#allocation4], 1
    %521 = vsyncpa %s520, 1

</llo_original>
